<compile_context>
chip_gen: v5e
topology: v5e:2x2
jax: 0.10.0
libtpu: 0.0.40
codegen_flags: <defaults>
</compile_context>

<pallas_src>
import functools

import jax
import jax.numpy as jnp
from jax.experimental import pallas as pl
from jax.experimental.pallas import tpu as pltpu

IN_DIM = 20
HIDDEN = 256
OUT_DIM = 10


def mlp_kernel(x_ref, w1_ref, b1_ref, w2_ref, b2_ref, o_ref):
    # x: (tb, 20) f32 ; w1: (20, 256) bf16 ; b1: (1, 256) f32
    # w2: (256, 10) bf16 ; b2: (1, 10) f32 ; o: (tb, 10) f32
    x = x_ref[...].astype(jnp.bfloat16)                       # cast in-kernel
    h = jnp.dot(x, w1_ref[...], preferred_element_type=jnp.float32)
    h = jnp.maximum(h + b1_ref[...], 0.0)                     # nn.ReLU(), f32
    y = jnp.dot(h.astype(jnp.bfloat16), w2_ref[...],
                preferred_element_type=jnp.float32) + b2_ref[...]
    o_ref[...] = y.astype(o_ref.dtype)


def _round_up(n, m):
    return ((n + m - 1) // m) * m


def _batch_tile(B, block_b):
    # Pick a sublane-legal batch tile without padding B in HBM.
    if B > block_b:
        return _round_up(block_b, 16)        # multiple of 16; ragged tail OK
    if B >= 32:
        # Split into two tiles so a v7x megacore can use both TensorCores.
        return _round_up(pl.cdiv(B, 2), 16)
    return B                                 # block == full dim is always legal


@functools.partial(jax.jit, static_argnames=("block_b",))
def my_sequential_forward(x, w1_bf16, b1, w2_bf16, b2, *, block_b=1024):
    B, in_dim = x.shape
    hidden = w1_bf16.shape[1]
    out_dim = w2_bf16.shape[1]

    tb = _batch_tile(B, block_b)
    grid = (pl.cdiv(B, tb),)

    cost = pl.CostEstimate(
        flops=2 * B * (in_dim * hidden + hidden * out_dim),
        transcendentals=0,
        bytes_accessed=(x.size * 4
                        + (w1_bf16.size + w2_bf16.size) * 2
                        + (b1.size + b2.size) * 4
                        + B * out_dim * 4),
    )

    return pl.pallas_call(
        mlp_kernel,
        out_shape=jax.ShapeDtypeStruct((B, out_dim), jnp.float32),
        grid=grid,
        in_specs=[
            pl.BlockSpec((tb, in_dim), lambda i: (i, 0)),       # x: streamed tiles
            pl.BlockSpec((in_dim, hidden), lambda i: (0, 0)),   # W1: VMEM-resident
            pl.BlockSpec((1, hidden), lambda i: (0, 0)),        # b1: VMEM-resident
            pl.BlockSpec((hidden, out_dim), lambda i: (0, 0)),  # W2: VMEM-resident
            pl.BlockSpec((1, out_dim), lambda i: (0, 0)),       # b2: VMEM-resident
        ],
        out_specs=pl.BlockSpec((tb, out_dim), lambda i: (i, 0)),
        compiler_params=pltpu.CompilerParams(
            dimension_semantics=("parallel",)),                 # v7x: both TCs
        cost_estimate=cost,
    )(x, w1_bf16, b1, w2_bf16, b2)


def init_params(key, in_dim=IN_DIM, hidden_dim=HIDDEN, out_dim=OUT_DIM):
    # PyTorch nn.Linear default init: U(-1/sqrt(fan_in), 1/sqrt(fan_in))
    k1, k2, k3, k4 = jax.random.split(key, 4)
    bound1 = 1.0 / jnp.sqrt(in_dim)
    bound2 = 1.0 / jnp.sqrt(hidden_dim)
    w1 = jax.random.uniform(k1, (in_dim, hidden_dim), jnp.float32, -bound1, bound1)
    b1 = jax.random.uniform(k2, (1, hidden_dim), jnp.float32, -bound1, bound1)
    w2 = jax.random.uniform(k3, (hidden_dim, out_dim), jnp.float32, -bound2, bound2)
    b2 = jax.random.uniform(k4, (1, out_dim), jnp.float32, -bound2, bound2)
    return w1, b1, w2, b2


def prepare_params(w1, b1, w2, b2):
    # One-time cast of MXU operands to bf16, hoisted out of the forward pass.
    return (w1.astype(jnp.bfloat16), b1.astype(jnp.float32),
            w2.astype(jnp.bfloat16), b2.astype(jnp.float32))


if __name__ == "__main__":
    key = jax.random.PRNGKey(0)
    kx, kp = jax.random.split(key)

    # X = torch.rand(2, 20)  -> uniform [0,1), batch=2, features=20
    x = jax.random.uniform(kx, (2, IN_DIM), jnp.float32)
    w1, b1, w2, b2 = init_params(kp)
    w1b, b1p, w2b, b2p = prepare_params(w1, b1, w2, b2)

    out = my_sequential_forward(x, w1b, b1p, w2b, b2p)
    out = jax.block_until_ready(out)
    assert out.shape == (2, OUT_DIM)

    # Reference with the same bf16-operand / f32-accumulate math as the kernel.
    h_ref = jnp.maximum(
        jnp.dot(x.astype(jnp.bfloat16), w1b,
                preferred_element_type=jnp.float32) + b1, 0.0)
    ref = jnp.dot(h_ref.astype(jnp.bfloat16), w2b,
                  preferred_element_type=jnp.float32) + b2
    assert jnp.allclose(out, ref, atol=1e-3, rtol=1e-3), \
        float(jnp.max(jnp.abs(out - ref)))

    # Loose sanity check against full-f32 math (bf16 quantization tolerance).
    ref_f32 = jnp.maximum(x @ w1 + b1, 0.0) @ w2 + b2
    assert jnp.allclose(out, ref_f32, atol=5e-2, rtol=5e-2)

    print("KERNEL_OK")
</pallas_src>

<mosaic_0001>
module attributes {stable_mosaic.version = 11 : i64} {
  func.func @mlp_kernel(%arg0: i32, %arg1: memref<2x20xf32, #tpu.memory_space<vmem>>, %arg2: memref<20x256xbf16, #tpu.memory_space<vmem>>, %arg3: memref<1x256xf32, #tpu.memory_space<vmem>>, %arg4: memref<256x10xbf16, #tpu.memory_space<vmem>>, %arg5: memref<1x10xf32, #tpu.memory_space<vmem>>, %arg6: memref<2x10xf32, #tpu.memory_space<vmem>>) attributes {dimension_semantics = [#tpu.dimension_semantics<parallel>], iteration_bounds = array<i64: 1>, scalar_prefetch = 0 : i64, scratch_operands = 0 : i64, tpu.core_type = #tpu.core_type<tc>, window_params = [{transform_indices = @transform_0, window_bounds = array<i64: 2, 20>}, {pipeline_mode = #tpu.pipeline_mode<synchronous>, transform_indices = @transform_1, window_bounds = array<i64: 20, 256>}, {pipeline_mode = #tpu.pipeline_mode<synchronous>, transform_indices = @transform_2, window_bounds = array<i64: 1, 256>}, {pipeline_mode = #tpu.pipeline_mode<synchronous>, transform_indices = @transform_3, window_bounds = array<i64: 256, 10>}, {pipeline_mode = #tpu.pipeline_mode<synchronous>, transform_indices = @transform_4, window_bounds = array<i64: 1, 10>}, {transform_indices = @transform_5, window_bounds = array<i64: 2, 10>}]} {
    %c0 = arith.constant 0 : index
    %c0_0 = arith.constant 0 : index
    %0 = vector.load %arg1[%c0, %c0_0] : memref<2x20xf32, #tpu.memory_space<vmem>>, vector<2x20xf32>
    %1 = arith.truncf %0 : vector<2x20xf32> to vector<2x20xbf16>
    %c0_1 = arith.constant 0 : index
    %c0_2 = arith.constant 0 : index
    %2 = vector.load %arg2[%c0_1, %c0_2] : memref<20x256xbf16, #tpu.memory_space<vmem>>, vector<20x256xbf16>
    %cst = arith.constant dense<0.000000e+00> : vector<2x256xf32>
    %3 = tpu.matmul %1, %2, %cst {dimension_numbers = #tpu.dot_dimension_numbers<[1], [0], [0], [1], [0, 0, 1, 1], [], []>} : vector<2x20xbf16>, vector<20x256xbf16>, vector<2x256xf32> -> vector<2x256xf32>
    %c0_3 = arith.constant 0 : index
    %c0_4 = arith.constant 0 : index
    %4 = vector.load %arg3[%c0_3, %c0_4] : memref<1x256xf32, #tpu.memory_space<vmem>>, vector<1x256xf32>
    %5 = vector.broadcast %4 : vector<1x256xf32> to vector<2x256xf32>
    %6 = arith.addf %3, %5 : vector<2x256xf32>
    %cst_5 = arith.constant 0.000000e+00 : f32
    %7 = vector.broadcast %cst_5 : f32 to vector<2x256xf32>
    %8 = arith.maximumf %6, %7 : vector<2x256xf32>
    %9 = arith.truncf %8 : vector<2x256xf32> to vector<2x256xbf16>
    %c0_6 = arith.constant 0 : index
    %c0_7 = arith.constant 0 : index
    %10 = vector.load %arg4[%c0_6, %c0_7] : memref<256x10xbf16, #tpu.memory_space<vmem>>, vector<256x10xbf16>
    %cst_8 = arith.constant dense<0.000000e+00> : vector<2x10xf32>
    %11 = tpu.matmul %9, %10, %cst_8 {dimension_numbers = #tpu.dot_dimension_numbers<[1], [0], [0], [1], [0, 0, 1, 1], [], []>} : vector<2x256xbf16>, vector<256x10xbf16>, vector<2x10xf32> -> vector<2x10xf32>
    %c0_9 = arith.constant 0 : index
    %c0_10 = arith.constant 0 : index
    %12 = vector.load %arg5[%c0_9, %c0_10] : memref<1x10xf32, #tpu.memory_space<vmem>>, vector<1x10xf32>
    %13 = vector.broadcast %12 : vector<1x10xf32> to vector<2x10xf32>
    %14 = arith.addf %11, %13 : vector<2x10xf32>
    %c0_11 = arith.constant 0 : index
    %c0_12 = arith.constant 0 : index
    %15 = vector.load %arg6[%c0_11, %c0_12] : memref<2x10xf32, #tpu.memory_space<vmem>>, vector<2x10xf32>
    tpu.vector_store %arg6[%c0_11, %c0_12], %14 {strides = array<i32>} : memref<2x10xf32, #tpu.memory_space<vmem>>, vector<2x10xf32>,
    return
  }
  func.func @transform_0(%arg0: i32) -> (i32, i32) {
    %c0_i32 = arith.constant 0 : i32
    %c0_i32_0 = arith.constant 0 : i32
    return %arg0, %c0_i32 : i32, i32
  }
  func.func @transform_1(%arg0: i32) -> (i32, i32) {
    %c0_i32 = arith.constant 0 : i32
    %c0_i32_0 = arith.constant 0 : i32
    %c0_i32_1 = arith.constant 0 : i32
    return %c0_i32, %c0_i32_0 : i32, i32
  }
  func.func @transform_2(%arg0: i32) -> (i32, i32) {
    %c0_i32 = arith.constant 0 : i32
    %c0_i32_0 = arith.constant 0 : i32
    %c0_i32_1 = arith.constant 0 : i32
    return %c0_i32, %c0_i32_0 : i32, i32
  }
  func.func @transform_3(%arg0: i32) -> (i32, i32) {
    %c0_i32 = arith.constant 0 : i32
    %c0_i32_0 = arith.constant 0 : i32
    %c0_i32_1 = arith.constant 0 : i32
    return %c0_i32, %c0_i32_0 : i32, i32
  }
  func.func @transform_4(%arg0: i32) -> (i32, i32) {
    %c0_i32 = arith.constant 0 : i32
    %c0_i32_0 = arith.constant 0 : i32
    %c0_i32_1 = arith.constant 0 : i32
    return %c0_i32, %c0_i32_0 : i32, i32
  }
  func.func @transform_5(%arg0: i32) -> (i32, i32) {
    %c0_i32 = arith.constant 0 : i32
    %c0_i32_0 = arith.constant 0 : i32
    return %arg0, %c0_i32 : i32, i32
  }
}

</mosaic_0001>

<llo_original>
// kernel: my_sequential_forward.1
$region0: #{my_sequential_forward.1}
  #allocation0 [shape = 'u32[]', space=smem, size = 0x4, offset = 0x4, fixed_abs, tag = 'smem constant byte address 0x4 - core index']
  #allocation1 [shape = 'u32[72,128]{1,0:T(1,128)}', space=vmem, size = 0x9000, scoped, tag = 'internal scratch']
  %s0 = inlined_call_operand.vmem [shape: f32[2,20], index: 0, kind: input, shape index: {}]
  %s1 = inlined_call_operand.vmem [shape: bf16[20,256], index: 1, kind: input, shape index: {}]
  %s2 = inlined_call_operand.vmem [shape: f32[1,256], index: 2, kind: input, shape index: {}]
  %s3 = inlined_call_operand.vmem [shape: bf16[256,10], index: 3, kind: input, shape index: {}]
  %s4 = inlined_call_operand.vmem [shape: f32[1,10], index: 4, kind: input, shape index: {}]
  %s5 = inlined_call_operand.hbm [shape: f32[2,10], index: 5, kind: output, shape index: {}]
  %s6 = sld [smem:[#allocation0]]
  $region30: #{my_sequential_forward.1} parent=0
    _
  %s8 = ssub.s32 1, %s6
  %s9 = scalar_select 0, %s8, %s6
  $region1: #{my_sequential_forward.1} parent=0
    #allocation2 [shape = 'u8[1024]{0}', space=vmem, size = 0x400, scoped, tag = 'output window, operand 0, single buffered']
    #allocation3 [shape = 's32[1]{0}', space=sflag, size = 0x4, scoped, tag = 'scoped memory for my_sequential_forward.1']
    %10 = vsyncpa [#allocation3], 0
    // Predicated region
    $region2: #{my_sequential_forward.1} parent=1 // pred_check
      _
    $region3: #{my_sequential_forward.1} parent=1 // pred_check_branch
      %12 = sbr.rel (0) target = $region5
    $region4: #{my_sequential_forward.1} parent=1 // pred_region
      _
    $region5: #{my_sequential_forward.1} parent=1 // pred_fallthru
      _
    // Predicated region
    $region6: #{my_sequential_forward.1} parent=1 // pred_check
      _
    $region7: #{my_sequential_forward.1} parent=1 // pred_check_branch
      %14 = sbr.rel (0) target = $region9
    $region8: #{my_sequential_forward.1} parent=1 // pred_region
      _
    $region9: #{my_sequential_forward.1} parent=1 // pred_fallthru
      _
    // Predicated region
    $region10: #{my_sequential_forward.1} parent=1 // pred_check
      _
    $region11: #{my_sequential_forward.1} parent=1 // pred_check_branch
      %16 = sbr.rel (0) target = $region13
    $region12: #{my_sequential_forward.1} parent=1 // pred_region
      _
    $region13: #{my_sequential_forward.1} parent=1 // pred_fallthru
      _
    // Predicated region
    $region14: #{my_sequential_forward.1} parent=1 // pred_check
      _
    $region15: #{my_sequential_forward.1} parent=1 // pred_check_branch
      %18 = sbr.rel (0) target = $region17
    $region16: #{my_sequential_forward.1} parent=1 // pred_region
      _
    $region17: #{my_sequential_forward.1} parent=1 // pred_fallthru
      _
    // Predicated region
    $region18: #{my_sequential_forward.1} parent=1 // pred_check
      _
    $region19: #{my_sequential_forward.1} parent=1 // pred_check_branch
      %20 = sbr.rel (0) target = $region21
    $region20: #{my_sequential_forward.1} parent=1 // pred_region
      _
    $region21: #{my_sequential_forward.1} parent=1 // pred_fallthru
      _
    %v22 = vld [vmem:[%s0] sm:$0x3]
    %v23 = vpack.c.bf16 %v22, %v22
    %v24 = vld [vmem:[%s1] sm:$0xff]
    %v25 = vld [vmem:[%s1 + $0x8] sm:$0xff]
    %v26 = vld [vmem:[%s1 + $0x10] sm:$0x33]
    %v27 = vld [vmem:[%s2] sm:$0x3]
    %v29 = vperm.slane %v27, 0
    %v30 = vperm.slane %v27, 1
    %v36 = vunpack.c.l.b16 %v24
    %v37 = vunpack.c.h.b16 %v24
    %v38 = vunpack.c.l.b16 %v25
    %v39 = vunpack.c.h.b16 %v25
    %v40 = vunpack.c.l.b16 %v26
    %v41 = vunpack.c.h.b16 %v26
    %v42 = vpack.c.b16 %v38, %v36
    %v43 = vpack.c.b16 %v39, %v37
    %v44 = vpack.c.b16 %v40, %v40
    %v45 = vpack.c.b16 %v41, %v41
    %vm48 = vcmask 162816
    %v50 = vsel %vm48, %v23, 0
    %vm52 = vcmask 1041408
    %v54 = vsel %vm52, %v44, 0
    %v57 = vsel %vm52, %v45, 0
    %59 = vmatpush.bf16.msra.mxu0 0
    %60 = vmatpush.bf16.msra.mxu0 0
    %61 = vmatpush.bf16.msra.mxu0 0
    %62 = vmatpush.bf16.msra.mxu0 0
    %63 = vmatpush.bf16.msra.mxu0 0
    %64 = vmatpush.bf16.msra.mxu0 0
    %65 = vmatpush.bf16.msra.mxu0 %v54
    %66 = vmatpush.bf16.msra.mxu0 %v42
    %67 = vmatmul.bf16.gmra.mxu0 %v50
    %v68 = vpop.f32.mrf.mxu0
    %v69 = vadd.f32 %v29, %v68
    %v70 = vpop.f32.mrf.mxu0
    %71 = vdwg.mxu0
    %72 = vmatpush.bf16.msra.mxu0 0
    %73 = vmatpush.bf16.msra.mxu0 0
    %74 = vmatpush.bf16.msra.mxu0 0
    %75 = vmatpush.bf16.msra.mxu0 0
    %76 = vmatpush.bf16.msra.mxu0 0
    %77 = vmatpush.bf16.msra.mxu0 0
    %78 = vmatpush.bf16.msra.mxu0 %v57
    %79 = vmatpush.bf16.msra.mxu0 %v43
    %80 = vmatmul.bf16.gmra.mxu0 %v50
    %v81 = vpop.f32.mrf.mxu0
    %v82 = vadd.f32 %v30, %v81
    %v83 = vpop.f32.mrf.mxu0
    %84 = vdwg.mxu0
    %v85 = vmax.f32 %v69, 0.0
    %v86 = vmax.f32 %v82, 0.0
    %v87 = vpack.c.bf16 %v85, %v85
    %v88 = vpack.c.bf16 %v86, %v86
    %v89 = vld [vmem:[%s3] sm:$0xf]
    %v90 = vld [vmem:[%s3 + $0x4] sm:$0xf]
    %v91 = vld [vmem:[%s3 + $0x8] sm:$0xf]
    %v92 = vld [vmem:[%s3 + $0xc] sm:$0xf]
    %v93 = vld [vmem:[%s3 + $0x10] sm:$0xf]
    %v94 = vld [vmem:[%s3 + $0x14] sm:$0xf]
    %v95 = vld [vmem:[%s3 + $0x18] sm:$0xf]
    %v96 = vld [vmem:[%s3 + $0x1c] sm:$0xf]
    %v97 = vld [vmem:[%s3 + $0x20] sm:$0xf]
    %v98 = vld [vmem:[%s3 + $0x24] sm:$0xf]
    %v99 = vld [vmem:[%s3 + $0x28] sm:$0xf]
    %v100 = vld [vmem:[%s3 + $0x2c] sm:$0xf]
    %v101 = vld [vmem:[%s3 + $0x30] sm:$0xf]
    %v102 = vld [vmem:[%s3 + $0x34] sm:$0xf]
    %v103 = vld [vmem:[%s3 + $0x38] sm:$0xf]
    %v104 = vld [vmem:[%s3 + $0x3c] sm:$0xf]
    %v105 = vld [vmem:[%s3 + $0x40] sm:$0xf]
    %v106 = vld [vmem:[%s3 + $0x44] sm:$0xf]
    %v107 = vld [vmem:[%s3 + $0x48] sm:$0xf]
    %v108 = vld [vmem:[%s3 + $0x4c] sm:$0xf]
    %v109 = vld [vmem:[%s3 + $0x50] sm:$0xf]
    %v110 = vld [vmem:[%s3 + $0x54] sm:$0xf]
    %v111 = vld [vmem:[%s3 + $0x58] sm:$0xf]
    %v112 = vld [vmem:[%s3 + $0x5c] sm:$0xf]
    %v113 = vld [vmem:[%s3 + $0x60] sm:$0xf]
    %v114 = vld [vmem:[%s3 + $0x64] sm:$0xf]
    %v115 = vld [vmem:[%s3 + $0x68] sm:$0xf]
    %v116 = vld [vmem:[%s3 + $0x6c] sm:$0xf]
    %v117 = vld [vmem:[%s3 + $0x70] sm:$0xf]
    %v118 = vld [vmem:[%s3 + $0x74] sm:$0xf]
    %v119 = vld [vmem:[%s3 + $0x78] sm:$0xf]
    %v120 = vld [vmem:[%s3 + $0x7c] sm:$0xf]
    %v121 = vld [vmem:[%s4] sm:$0x1]
    %v123 = vperm.slane %v121, 0
    %v157 = vunpack.c.l.b16 %v89
    %v158 = vunpack.c.l.b16 %v90
    %v159 = vunpack.c.l.b16 %v91
    %v160 = vunpack.c.l.b16 %v92
    %v161 = vunpack.c.l.b16 %v93
    %v162 = vunpack.c.l.b16 %v94
    %v163 = vunpack.c.l.b16 %v95
    %v164 = vunpack.c.l.b16 %v96
    %v165 = vunpack.c.l.b16 %v97
    %v166 = vunpack.c.l.b16 %v98
    %v167 = vunpack.c.l.b16 %v99
    %v168 = vunpack.c.l.b16 %v100
    %v169 = vunpack.c.l.b16 %v101
    %v170 = vunpack.c.l.b16 %v102
    %v171 = vunpack.c.l.b16 %v103
    %v172 = vunpack.c.l.b16 %v104
    %v173 = vunpack.c.l.b16 %v105
    %v174 = vunpack.c.l.b16 %v106
    %v175 = vunpack.c.l.b16 %v107
    %v176 = vunpack.c.l.b16 %v108
    %v177 = vunpack.c.l.b16 %v109
    %v178 = vunpack.c.l.b16 %v110
    %v179 = vunpack.c.l.b16 %v111
    %v180 = vunpack.c.l.b16 %v112
    %v181 = vunpack.c.l.b16 %v113
    %v182 = vunpack.c.l.b16 %v114
    %v183 = vunpack.c.l.b16 %v115
    %v184 = vunpack.c.l.b16 %v116
    %v185 = vunpack.c.l.b16 %v117
    %v186 = vunpack.c.l.b16 %v118
    %v187 = vunpack.c.l.b16 %v119
    %v188 = vunpack.c.l.b16 %v120
    %v189 = vpack.c.b16 %v158, %v157
    %v190 = vpack.c.b16 %v160, %v159
    %v191 = vpack.c.b16 %v162, %v161
    %v192 = vpack.c.b16 %v164, %v163
    %v193 = vpack.c.b16 %v166, %v165
    %v194 = vpack.c.b16 %v168, %v167
    %v195 = vpack.c.b16 %v170, %v169
    %v196 = vpack.c.b16 %v172, %v171
    %v197 = vpack.c.b16 %v174, %v173
    %v198 = vpack.c.b16 %v176, %v175
    %v199 = vpack.c.b16 %v178, %v177
    %v200 = vpack.c.b16 %v180, %v179
    %v201 = vpack.c.b16 %v182, %v181
    %v202 = vpack.c.b16 %v184, %v183
    %v203 = vpack.c.b16 %v186, %v185
    %v204 = vpack.c.b16 %v188, %v187
    %221 = vmatpush.bf16.msra.mxu0 %v196
    %222 = vmatpush.bf16.msra.mxu0 %v195
    %223 = vmatpush.bf16.msra.mxu0 %v194
    %224 = vmatpush.bf16.msra.mxu0 %v193
    %225 = vmatpush.bf16.msra.mxu0 %v192
    %226 = vmatpush.bf16.msra.mxu0 %v191
    %227 = vmatpush.bf16.msra.mxu0 %v190
    %228 = vmatpush.bf16.msra.mxu0 %v189
    %229 = vmatmul.bf16.gmra.mxu0 %v87
    %v230 = vpop.f32.mrf.mxu0
    %v231 = vadd.f32 %v123, %v230
    %v232 = vpop.f32.mrf.mxu0
    %233 = vdwg.mxu0
    %234 = vmatpush.bf16.msra.mxu0 %v204
    %235 = vmatpush.bf16.msra.mxu0 %v203
    %236 = vmatpush.bf16.msra.mxu0 %v202
    %237 = vmatpush.bf16.msra.mxu0 %v201
    %238 = vmatpush.bf16.msra.mxu0 %v200
    %239 = vmatpush.bf16.msra.mxu0 %v199
    %240 = vmatpush.bf16.msra.mxu0 %v198
    %241 = vmatpush.bf16.msra.mxu0 %v197
    %242 = vmatmul.bf16.gmra.mxu0 %v88
    %v243 = vpop.f32.mrf.mxu0
    %v244 = vadd.f32 %v231, %v243
    %v245 = vpop.f32.mrf.mxu0
    %246 = vdwg.mxu0
    %vm247 = vcmask 74752
    %248 = vst.msk [vmem:[#allocation2] sm:$0x3] %vm247, %v244
    // Predicated region
    $region22: #{my_sequential_forward.1} parent=1 // pred_check
      _
    $region23: #{my_sequential_forward.1} parent=1 // pred_check_branch
      %250 = sbr.rel (0) target = $region25
    $region24: #{my_sequential_forward.1} parent=1 // pred_region
      %252 = vsyncadd [#allocation3], 0
      %s254 = sshll.u32 [#allocation2], 4
      %s255 = int_to_ptr.vmem [resolvable:$true] %s254
      %s256 = sshll.u32 %s5, 4
      %s257 = int_to_ptr.hbm [resolvable:$true] %s256
      %259 = dma.vmem_to_hbm [thread:$0]  %s255, 32, %s257, [#allocation3]
    $region25: #{my_sequential_forward.1} parent=1 // pred_fallthru
      _
    // Predicated region
    $region26: #{my_sequential_forward.1} parent=1 // pred_check
      _
    $region27: #{my_sequential_forward.1} parent=1 // pred_check_branch
      %261 = sbr.rel (0) target = $region29
    $region28: #{my_sequential_forward.1} parent=1 // pred_region
      %263 = dma.done [#allocation3], 32
    $region29: #{my_sequential_forward.1} parent=1 // pred_fallthru
      _
    %264 = vsyncpa [#allocation3], 1

</llo_original>
